<compile_context>
chip_gen: v7x
topology: tpu7x:2x2x1
jax: 0.10.0
libtpu: 0.0.40
codegen_flags: <defaults>
</compile_context>

<pallas_src>
import math

import jax
import jax.numpy as jnp
from jax.experimental import pallas as pl
from jax.experimental.pallas import tpu as pltpu


def _svm_kernel(x_ref, w_ref, b_ref, o_ref):
    # x_ref: (TB, Dp) VMEM lane-dense packed batch tile
    # w_ref: (Dp, R)  VMEM block-diagonal weight, resident across the grid
    # b_ref: (1,)     SMEM scalar bias
    # o_ref: (TB, R)  VMEM output tile
    acc = jnp.dot(x_ref[...], w_ref[...], preferred_element_type=jnp.float32)
    o_ref[...] = (acc + b_ref[0]).astype(o_ref.dtype)


def _choose_pack_factor(batch, feat, max_packed_width=512):
    """Largest R such that R*feat is a multiple of 128 (lane width), R divides
    the batch, and R*feat <= max_packed_width.  R=1 -> no packing (still
    correct, just lane-padded like the original kernel)."""
    if feat % 128 == 0:
        return 1                                     # already lane dense
    base = 128 // math.gcd(feat, 128)                # smallest R with R*feat % 128 == 0
    best, r = 1, base
    while r * feat <= max_packed_width:
        if batch % r == 0:
            best = r
        r += base
    return best


def _vmem_plan():
    """(VMEM byte budget for our buffers, vmem_limit_bytes) - generation aware."""
    budget, limit = 40 << 20, 48 << 20               # safe on v7x (64 MiB / TC)
    try:
        cap = int(pltpu.get_tpu_info().vmem_capacity_bytes)
        if cap >= (128 << 20):                       # v5e / v6e have headroom
            budget, limit = 56 << 20, 64 << 20
    except Exception:
        pass
    return budget, limit


def _choose_block_rows(packed_batch, packed_feat, itemsize, vmem_budget):
    """Rows per grid step, budgeted with lane-PADDED VMEM footprints."""
    lane_pad = lambda n: ((n + 127) // 128) * 128
    sublane_pad = lambda n: ((n + 7) // 8) * 8
    # Double-buffered footprints in VMEM:
    w_bytes = 2 * sublane_pad(packed_feat) * 128 * itemsize   # (Dp, R) weight (R pads to 128 lanes)
    in_row = lane_pad(packed_feat) * itemsize                 # x tile row
    out_row = 128 * itemsize                                  # (TB, R) out row (R < 128 pads to 128)
    per_row = 2 * (in_row + out_row)
    tb = max(8, (vmem_budget - w_bytes) // per_row)
    # Keep >= ~4 grid steps so v7x's two TensorCores both get work and the
    # BlockSpec pipeline has something to overlap.
    tb = min(tb, max(8, pl.cdiv(packed_batch, 4)))
    tb = max(8, (tb // 8) * 8)                                # sublane alignment
    return int(tb)


def svm_forward(x, weight, bias, block_rows=None):
    """y = x @ weight.T + bias  (weight: (1, D), bias: (1,)) -> (B, 1)."""
    B, D = x.shape
    assert weight.shape == (1, D) and bias.shape == (1,)

    # --- small-D lane packing (free, contiguous reshape) --------------------
    R = _choose_pack_factor(B, D)
    Bp, Dp = B // R, R * D
    x_p = x.reshape(Bp, Dp)
    # Block-diagonal weight: Wb[r*D + d, r] = w[d].  Kept in x.dtype so bf16
    # inputs run the MXU natively in bf16 with an f32 accumulator.
    w_col = weight.astype(x.dtype).reshape(D, 1)
    wb = jnp.kron(jnp.eye(R, dtype=x.dtype), w_col)           # (Dp, R)
    b32 = bias.astype(jnp.float32)

    vmem_budget, vmem_limit = _vmem_plan()
    tb = block_rows if block_rows is not None else _choose_block_rows(
        Bp, Dp, x.dtype.itemsize, vmem_budget)
    if tb < Bp and tb % 8 != 0:                               # (8, 128) tiling rule
        tb = max(8, (tb // 8) * 8)
    tb = min(tb, Bp)

    # TODO(synk): for feature dims so large that a single (tb, Dp) block no
    # longer fits VMEM, add a trailing "arbitrary" grid axis over Dp with an
    # f32 accumulator (pl.when init/finalize).  Not needed at this module's sizes.
    out = pl.pallas_call(
        _svm_kernel,
        out_shape=jax.ShapeDtypeStruct((Bp, R), x.dtype),
        grid_spec=pltpu.PrefetchScalarGridSpec(
            num_scalar_prefetch=0,
            grid=(pl.cdiv(Bp, tb),),
            in_specs=[
                # streamed, lane-dense packed batch tiles (the only big HBM read)
                pl.BlockSpec((tb, Dp), lambda i: (i, 0)),
                # tiny block-diagonal weight, VMEM-resident across the grid
                pl.BlockSpec((Dp, R), lambda i: (0, 0)),
                # scalar bias in SMEM (no VMEM block, no per-step DMA)
                pl.BlockSpec(memory_space=pltpu.MemorySpace.SMEM),
            ],
            out_specs=pl.BlockSpec((tb, R), lambda i: (i, 0)),
        ),
        compiler_params=pltpu.CompilerParams(
            dimension_semantics=("parallel",),                # dual-TC on v7x
            vmem_limit_bytes=vmem_limit,
        ),
    )(x_p, wb, b32)

    # Row-major flatten of (Bp, R) restores the original batch order.
    return out.reshape(B, 1)


if __name__ == "__main__":
    input_dim = 32
    batch = 256

    key = jax.random.PRNGKey(0)
    kx, kw, kb = jax.random.split(key, 3)

    # nn.Linear-style init: U(-1/sqrt(D), 1/sqrt(D)).  Inputs are snapped to
    # the bf16 grid so the correctness check is insensitive to the MXU's f32
    # pass precision across TPU generations (products of bf16-representable
    # values are exact in f32, accumulation stays f32).
    bound = 1.0 / (input_dim ** 0.5)
    weight = jax.random.uniform(kw, (1, input_dim), jnp.float32, -bound, bound)
    bias = jax.random.uniform(kb, (1,), jnp.float32, -bound, bound)
    x = jax.random.normal(kx, (batch, input_dim), jnp.float32)
    weight = weight.astype(jnp.bfloat16).astype(jnp.float32)
    x = x.astype(jnp.bfloat16).astype(jnp.float32)

    y = svm_forward(x, weight, bias)
    jax.block_until_ready(y)

    # sanity check against plain JAX reference
    y_ref = x @ weight.T + bias
    assert y.shape == (batch, 1)
    assert jnp.allclose(y, y_ref, atol=1e-5, rtol=1e-5), float(
        jnp.max(jnp.abs(y - y_ref)))

    print("KERNEL_OK")
</pallas_src>

<mosaic_0001>
module attributes {stable_mosaic.version = 11 : i64} {
  func.func @_svm_kernel(%arg0: i32, %arg1: memref<8x512xf32, #tpu.memory_space<vmem>>, %arg2: memref<512x16xf32, #tpu.memory_space<vmem>>, %arg3: memref<1xf32, #tpu.memory_space<smem>>, %arg4: memref<8x16xf32, #tpu.memory_space<vmem>>) attributes {dimension_semantics = [#tpu.dimension_semantics<parallel>], iteration_bounds = array<i64: 2>, scalar_prefetch = 0 : i64, scratch_operands = 0 : i64, tpu.core_type = #tpu.core_type<tc>, window_params = [{transform_indices = @transform_0, window_bounds = array<i64: 8, 512>}, {pipeline_mode = #tpu.pipeline_mode<synchronous>, transform_indices = @transform_1, window_bounds = array<i64: 512, 16>}, {transform_indices = @transform_2, window_bounds = array<i64: 1>}, {transform_indices = @transform_3, window_bounds = array<i64: 8, 16>}]} {
    %c0 = arith.constant 0 : index
    %c0_0 = arith.constant 0 : index
    %0 = vector.load %arg1[%c0, %c0_0] : memref<8x512xf32, #tpu.memory_space<vmem>>, vector<8x512xf32>
    %c0_1 = arith.constant 0 : index
    %c0_2 = arith.constant 0 : index
    %1 = vector.load %arg2[%c0_1, %c0_2] : memref<512x16xf32, #tpu.memory_space<vmem>>, vector<512x16xf32>
    %cst = arith.constant dense<0.000000e+00> : vector<8x16xf32>
    %2 = tpu.matmul %0, %1, %cst {dimension_numbers = #tpu.dot_dimension_numbers<[1], [0], [0], [1], [0, 0, 1, 1], [], []>} : vector<8x512xf32>, vector<512x16xf32>, vector<8x16xf32> -> vector<8x16xf32>
    %c0_3 = arith.constant 0 : index
    %3 = memref.load %arg3[%c0_3] : memref<1xf32, #tpu.memory_space<smem>>
    %4 = vector.broadcast %3 : f32 to vector<8x16xf32>
    %5 = arith.addf %2, %4 : vector<8x16xf32>
    %c0_4 = arith.constant 0 : index
    %c0_5 = arith.constant 0 : index
    %6 = vector.load %arg4[%c0_4, %c0_5] : memref<8x16xf32, #tpu.memory_space<vmem>>, vector<8x16xf32>
    tpu.vector_store %arg4[%c0_4, %c0_5], %5 {strides = array<i32>} : memref<8x16xf32, #tpu.memory_space<vmem>>, vector<8x16xf32>,
    return
  }
  func.func @transform_0(%arg0: i32) -> (i32, i32) {
    %c0_i32 = arith.constant 0 : i32
    %c0_i32_0 = arith.constant 0 : i32
    return %arg0, %c0_i32 : i32, i32
  }
  func.func @transform_1(%arg0: i32) -> (i32, i32) {
    %c0_i32 = arith.constant 0 : i32
    %c0_i32_0 = arith.constant 0 : i32
    %c0_i32_1 = arith.constant 0 : i32
    return %c0_i32, %c0_i32_0 : i32, i32
  }
  func.func @transform_2(%arg0: i32) -> i32 {
    %c0_i32 = arith.constant 0 : i32
    %c0_i32_0 = arith.constant 0 : i32
    return %c0_i32 : i32
  }
  func.func @transform_3(%arg0: i32) -> (i32, i32) {
    %c0_i32 = arith.constant 0 : i32
    %c0_i32_0 = arith.constant 0 : i32
    return %arg0, %c0_i32 : i32, i32
  }
}

</mosaic_0001>

<llo_original>
// kernel: tpu_custom_call.1
$region0: #{tpu_custom_call.1}
  #allocation0 [shape = 'u32[]', space=smem, size = 0x4, offset = 0x4, fixed_abs, tag = 'smem constant byte address 0x4 - core index']
  #allocation1 [shape = 'u32[144,128]{1,0:T(1,128)}', space=vmem, size = 0x12000, scoped, tag = 'internal scratch']
  #allocation2 [shape = 'f32[1]{0:T(128)S(6)}', space=smem, size = 0x200, scoped, tag = 'scoped memory for tpu_custom_call.1']
  %s0 = inlined_call_operand.vmem [shape: f32[16,512], index: 0, kind: input, shape index: {}]
  %s1 = inlined_call_operand.vmem [shape: f32[512,16], index: 1, kind: input, shape index: {}]
  %s2 = inlined_call_operand.<no memory space> [shape: f32[1], index: 2, kind: input, shape index: {}]
  %s3 = inlined_call_operand.hbm [shape: f32[16,16], index: 3, kind: output, shape index: {}]
  %s4 = sld [smem:[#allocation0]]
  $region45: #{tpu_custom_call.1} parent=0
    _
  %s6 = ssub.s32 1, %s4
  %s7 = scalar_select 0, %s6, %s4
  %8 = sst [smem:[#allocation2]] %s2
  $region1: #{tpu_custom_call.1} parent=0
    #allocation3 [shape = 'u8[8192]{0}', space=vmem, size = 0x2000, scoped, tag = 'output window, operand 0']
    #allocation4 [shape = 's32[2]{0}', space=sflag, size = 0x8, scoped, tag = 'scoped memory for tpu_custom_call.1']
    %9 = vsyncpa [#allocation4], 0
    %s10 = scalar_lea.sflag [#allocation4], 1
    %11 = vsyncpa %s10, 0
    loop: start=0, step=1, limit=4
    $region2: #{tpu_custom_call.1} parent=1 // loop_pre_header
      _
    $region3: #{tpu_custom_call.1} parent=1 // loop_header
      %s13 = sphi 0, %s17
      %p14 = scmp.ge.s32.totalorder %s13, 4
      %s23 = sphi 0, %s25
      %s26 = sphi 0, %s23
      %s27 = sphi 0, %s26
      %s43 = sphi 0, %s27
      %s47 = sphi 0, %s47
      %s49 = sphi 0, %s47
      %s50 = sphi 0, %s49
      %s64 = sphi 0, %s50
      %s68 = sphi 0, %s68
      %s70 = sphi 0, %s68
      %s71 = sphi 0, %s70
      %s85 = sphi 0, %s71
      %s91 = sphi 0, %s93
      %s94 = sphi 0, %s91
      %s95 = sphi 0, %s94
      %s111 = sphi 0, %s95
    $region4: #{tpu_custom_call.1} parent=1 // loop_header_branch
      %16 = sbr.rel (%p14) target = $region8
    $region5: #{tpu_custom_call.1} parent=1 // loop_body
      %s18 = ssub.s32 %s13, 1
      %s19 = ssub.s32 %s13, 2
      %s20 = sadd.s32 %s13, 1
      %s21 = ssub.s32 %s13, %s20
      %p22 = scmp.eq.s32.totalorder %s21, 0
      %s24 = sadd.s32 %s23, 1
      %s25 = scalar_select %p22, %s23, %s24
      %p28 = pneg %p22
      %p29 = scmp.eq.s32.totalorder %s13, 1
      %p30 = por %p28, %p29
      %p31 = scmp.ne.s32.totalorder %s23, %s26
      %p32 = scmp.eq.s32.totalorder %s13, 0
      %p33 = por %p31, %p32
      %p34 = scmp.ne.s32.totalorder %s23, %s26
      %p35 = scmp.eq.s32.totalorder %s18, 1
      %p36 = por %p34, %p35
      %p37 = scmp.ne.s32.totalorder %s26, %s27
      %p38 = scmp.eq.s32.totalorder %s18, 0
      %p39 = por %p37, %p38
      %p40 = scmp.ne.s32.totalorder %s26, %s27
      %p41 = scmp.eq.s32.totalorder %s19, 1
      %p42 = por %p40, %p41
      %p44 = scmp.ne.s32.totalorder %s27, %s43
      %p45 = scmp.eq.s32.totalorder %s19, 0
      %p46 = por %p44, %p45
      %s48 = sadd.s32 %s47, 1
      %p51 = scmp.eq.s32.totalorder %s13, 1
      %p52 = scmp.ne.s32.totalorder %s47, %s49
      %p53 = scmp.eq.s32.totalorder %s13, 0
      %p54 = por %p52, %p53
      %p55 = scmp.ne.s32.totalorder %s47, %s49
      %p56 = scmp.eq.s32.totalorder %s18, 1
      %p57 = por %p55, %p56
      %p58 = scmp.ne.s32.totalorder %s49, %s50
      %p59 = scmp.eq.s32.totalorder %s18, 0
      %p60 = por %p58, %p59
      %p61 = scmp.ne.s32.totalorder %s49, %s50
      %p62 = scmp.eq.s32.totalorder %s19, 1
      %p63 = por %p61, %p62
      %p65 = scmp.ne.s32.totalorder %s50, %s64
      %p66 = scmp.eq.s32.totalorder %s19, 0
      %p67 = por %p65, %p66
      %s69 = sadd.s32 %s68, 1
      %p72 = scmp.eq.s32.totalorder %s13, 1
      %p73 = scmp.ne.s32.totalorder %s68, %s70
      %p74 = scmp.eq.s32.totalorder %s13, 0
      %p75 = por %p73, %p74
      %p76 = scmp.ne.s32.totalorder %s68, %s70
      %p77 = scmp.eq.s32.totalorder %s18, 1
      %p78 = por %p76, %p77
      %p79 = scmp.ne.s32.totalorder %s70, %s71
      %p80 = scmp.eq.s32.totalorder %s18, 0
      %p81 = por %p79, %p80
      %p82 = scmp.ne.s32.totalorder %s70, %s71
      %p83 = scmp.eq.s32.totalorder %s19, 1
      %p84 = por %p82, %p83
      %p86 = scmp.ne.s32.totalorder %s71, %s85
      %p87 = scmp.eq.s32.totalorder %s19, 0
      %p88 = por %p86, %p87
      %s89 = ssub.s32 %s13, %s20
      %p90 = scmp.eq.s32.totalorder %s89, 0
      %s92 = sadd.s32 %s91, 1
      %s93 = scalar_select %p90, %s91, %s92
      %p96 = pneg %p90
      %p97 = scmp.eq.s32.totalorder %s13, 1
      %p98 = por %p96, %p97
      %p99 = scmp.ne.s32.totalorder %s91, %s94
      %p100 = scmp.eq.s32.totalorder %s13, 0
      %p101 = por %p99, %p100
      %p102 = scmp.ne.s32.totalorder %s91, %s94
      %p103 = scmp.eq.s32.totalorder %s18, 1
      %p104 = por %p102, %p103
      %p105 = scmp.ne.s32.totalorder %s94, %s95
      %p106 = scmp.eq.s32.totalorder %s18, 0
      %p107 = por %p105, %p106
      %p108 = scmp.ne.s32.totalorder %s94, %s95
      %p109 = scmp.eq.s32.totalorder %s19, 1
      %p110 = por %p108, %p109
      %p112 = scmp.ne.s32.totalorder %s95, %s111
      %p113 = scmp.eq.s32.totalorder %s19, 0
      %p114 = por %p112, %p113
      %p115 = scmp.le.s32.totalorder 1, %s13
      %p116 = scmp.lt.s32.totalorder %s13, 3
      %p117 = pnand %p115, %p116
      %p118 = pneg %p117
      // Predicated region
      $region9: #{tpu_custom_call.1} parent=5 // pred_check
        _
      $region10: #{tpu_custom_call.1} parent=5 // pred_check_branch
        %120 = sbr.rel (%p117) target = $region12
      $region11: #{tpu_custom_call.1} parent=5 // pred_region
        %s121 = ssub.s32 %s13, 1
        // Predicated region
        $region13: #{tpu_custom_call.1} parent=11 // pred_check
          %p122 = pneg %p60
        $region14: #{tpu_custom_call.1} parent=11 // pred_check_branch
          %124 = sbr.rel (%p122) target = $region16
        $region15: #{tpu_custom_call.1} parent=11 // pred_region
          _
        $region16: #{tpu_custom_call.1} parent=11 // pred_fallthru
          _
        // Predicated region
        $region17: #{tpu_custom_call.1} parent=11 // pred_check
          %p125 = pneg %p81
        $region18: #{tpu_custom_call.1} parent=11 // pred_check_branch
          %127 = sbr.rel (%p125) target = $region20
        $region19: #{tpu_custom_call.1} parent=11 // pred_region
          _
        $region20: #{tpu_custom_call.1} parent=11 // pred_fallthru
          _
      $region12: #{tpu_custom_call.1} parent=5 // pred_fallthru
        _
      %p128 = scmp.lt.s32.totalorder %s13, 2
      // Predicated region
      $region21: #{tpu_custom_call.1} parent=5 // pred_check
        %p129 = pneg %p128
      $region22: #{tpu_custom_call.1} parent=5 // pred_check_branch
        %131 = sbr.rel (%p129) target = $region24
      $region23: #{tpu_custom_call.1} parent=5 // pred_region
        // Predicated region
        $region25: #{tpu_custom_call.1} parent=23 // pred_check
          %p132 = pneg %p33
        $region26: #{tpu_custom_call.1} parent=23 // pred_check_branch
          %134 = sbr.rel (%p132) target = $region28
        $region27: #{tpu_custom_call.1} parent=23 // pred_region
          %p135 = scmp.lt.s32.totalorder %s13, 1
          %s136 = scalar_select %p135, %s13, 1
          %s137 = smul.addr %s136, 4
          %s138 = smul.addr %s137, 8
          %s139 = scalar_lea.vmem %s0, %s138
        $region28: #{tpu_custom_call.1} parent=23 // pred_fallthru
          _
      $region24: #{tpu_custom_call.1} parent=5 // pred_fallthru
        _
      %p140 = scmp.le.s32.totalorder 1, %s13
      %p141 = scmp.lt.s32.totalorder %s13, 3
      %p142 = pnand %p140, %p141
      %p143 = pneg %p142
      // Predicated region
      $region29: #{tpu_custom_call.1} parent=5 // pred_check
        _
      $region30: #{tpu_custom_call.1} parent=5 // pred_check_branch
        %145 = sbr.rel (%p142) target = $region32
      $region31: #{tpu_custom_call.1} parent=5 // pred_region
        %s146 = ssub.s32 %s13, 1
        %p147 = scmp.lt.s32.totalorder %s18, 1
        %s148 = scalar_select %p147, %s18, 1
        %s149 = smul.addr %s148, 4
        %s150 = smul.addr %s149, 8
        %s151 = scalar_lea.vmem %s0, %s150
        %p152 = pneg %p39
        %p153 = pneg %p36
        %p154 = pneg %p60
        %p155 = pneg %p57
        %p156 = pneg %p81
        %p157 = pneg %p78
        %p158 = pneg %p107
        %p159 = pneg %p104
        %s160 = sand.u32 %s94, 1
        %s161 = scalar_lea.sflag [#allocation4], %s160
        %s162 = sand.u32 %s94, 1
        %s163 = smul.addr %s162, 8
        %s164 = scalar_lea.vmem [#allocation3], %s163
        %p165 = scmp.lt.s32.totalorder %s18, 1
        %s166 = scalar_select %p165, %s18, 1
        %s167 = smul.addr %s166, 4
        %s168 = smul.addr %s167, 8
        %s169 = scalar_lea.vmem %s0, %s168
        %v170 = vld [vmem:[%s169] sm:$0xff]
        %v171 = vld [vmem:[%s169 + $0x8] sm:$0xff]
        %v172 = vld [vmem:[%s169 + $0x10] sm:$0xff]
        %v173 = vld [vmem:[%s169 + $0x18] sm:$0xff]
        %v174 = vld [vmem:[%s1] sm:$0xff]
        %v175 = vld [vmem:[%s1 + $0x8] sm:$0xff]
        %v176 = vld [vmem:[%s1 + $0x10] sm:$0xff]
        %v177 = vld [vmem:[%s1 + $0x18] sm:$0xff]
        %v178 = vld [vmem:[%s1 + $0x20] sm:$0xff]
        %v179 = vld [vmem:[%s1 + $0x28] sm:$0xff]
        %v180 = vld [vmem:[%s1 + $0x30] sm:$0xff]
        %v181 = vld [vmem:[%s1 + $0x38] sm:$0xff]
        %v182 = vld [vmem:[%s1 + $0x40] sm:$0xff]
        %v183 = vld [vmem:[%s1 + $0x48] sm:$0xff]
        %v184 = vld [vmem:[%s1 + $0x50] sm:$0xff]
        %v185 = vld [vmem:[%s1 + $0x58] sm:$0xff]
        %v186 = vld [vmem:[%s1 + $0x60] sm:$0xff]
        %v187 = vld [vmem:[%s1 + $0x68] sm:$0xff]
        %v188 = vld [vmem:[%s1 + $0x70] sm:$0xff]
        %v189 = vld [vmem:[%s1 + $0x78] sm:$0xff]
        %v190 = vld [vmem:[%s1 + $0x80] sm:$0xff]
        %v191 = vld [vmem:[%s1 + $0x88] sm:$0xff]
        %v192 = vld [vmem:[%s1 + $0x90] sm:$0xff]
        %v193 = vld [vmem:[%s1 + $0x98] sm:$0xff]
        %v194 = vld [vmem:[%s1 + $0xa0] sm:$0xff]
        %v195 = vld [vmem:[%s1 + $0xa8] sm:$0xff]
        %v196 = vld [vmem:[%s1 + $0xb0] sm:$0xff]
        %v197 = vld [vmem:[%s1 + $0xb8] sm:$0xff]
        %v198 = vld [vmem:[%s1 + $0xc0] sm:$0xff]
        %v199 = vld [vmem:[%s1 + $0xc8] sm:$0xff]
        %v200 = vld [vmem:[%s1 + $0xd0] sm:$0xff]
        %v201 = vld [vmem:[%s1 + $0xd8] sm:$0xff]
        %v202 = vld [vmem:[%s1 + $0xe0] sm:$0xff]
        %v203 = vld [vmem:[%s1 + $0xe8] sm:$0xff]
        %v204 = vld [vmem:[%s1 + $0xf0] sm:$0xff]
        %v205 = vld [vmem:[%s1 + $0xf8] sm:$0xff]
        %v206 = vld [vmem:[%s1 + $0x100] sm:$0xff]
        %v207 = vld [vmem:[%s1 + $0x108] sm:$0xff]
        %v208 = vld [vmem:[%s1 + $0x110] sm:$0xff]
        %v209 = vld [vmem:[%s1 + $0x118] sm:$0xff]
        %v210 = vld [vmem:[%s1 + $0x120] sm:$0xff]
        %v211 = vld [vmem:[%s1 + $0x128] sm:$0xff]
        %v212 = vld [vmem:[%s1 + $0x130] sm:$0xff]
        %v213 = vld [vmem:[%s1 + $0x138] sm:$0xff]
        %v214 = vld [vmem:[%s1 + $0x140] sm:$0xff]
        %v215 = vld [vmem:[%s1 + $0x148] sm:$0xff]
        %v216 = vld [vmem:[%s1 + $0x150] sm:$0xff]
        %v217 = vld [vmem:[%s1 + $0x158] sm:$0xff]
        %v218 = vld [vmem:[%s1 + $0x160] sm:$0xff]
        %v219 = vld [vmem:[%s1 + $0x168] sm:$0xff]
        %v220 = vld [vmem:[%s1 + $0x170] sm:$0xff]
        %v221 = vld [vmem:[%s1 + $0x178] sm:$0xff]
        %v222 = vld [vmem:[%s1 + $0x180] sm:$0xff]
        %v223 = vld [vmem:[%s1 + $0x188] sm:$0xff]
        %v224 = vld [vmem:[%s1 + $0x190] sm:$0xff]
        %v225 = vld [vmem:[%s1 + $0x198] sm:$0xff]
        %v226 = vld [vmem:[%s1 + $0x1a0] sm:$0xff]
        %v227 = vld [vmem:[%s1 + $0x1a8] sm:$0xff]
        %v228 = vld [vmem:[%s1 + $0x1b0] sm:$0xff]
        %v229 = vld [vmem:[%s1 + $0x1b8] sm:$0xff]
        %v230 = vld [vmem:[%s1 + $0x1c0] sm:$0xff]
        %v231 = vld [vmem:[%s1 + $0x1c8] sm:$0xff]
        %v232 = vld [vmem:[%s1 + $0x1d0] sm:$0xff]
        %v233 = vld [vmem:[%s1 + $0x1d8] sm:$0xff]
        %v234 = vld [vmem:[%s1 + $0x1e0] sm:$0xff]
        %v235 = vld [vmem:[%s1 + $0x1e8] sm:$0xff]
        %v236 = vld [vmem:[%s1 + $0x1f0] sm:$0xff]
        %v237 = vld [vmem:[%s1 + $0x1f8] sm:$0xff]
        %s238 = sld [smem:[#allocation2]]
        %v239 = vstv %s238
        %240 = vmatprep.subr.mxu0 0.0
        %241 = vmatpush1.msra.mxu0 %v174
        %242 = vmatprep.subr.mxu0 0.0
        %243 = vmatpush1.msra.mxu0 %v175
        %244 = vmatprep.subr.mxu0 0.0
        %245 = vmatpush1.msra.mxu0 %v176
        %246 = vmatprep.subr.mxu0 0.0
        %247 = vmatpush1.msra.mxu0 %v177
        %248 = vmatprep.subr.mxu0 0.0
        %249 = vmatpush1.msra.mxu0 %v178
        %250 = vmatprep.subr.mxu0 0.0
        %251 = vmatpush1.msra.mxu0 %v179
        %252 = vmatprep.subr.mxu0 0.0
        %253 = vmatpush1.msra.mxu0 %v180
        %254 = vmatprep.subr.mxu0 0.0
        %255 = vmatpush1.msra.mxu0 %v181
        %256 = vmatprep.subr.mxu0 0.0
        %257 = vmatpush1.msra.mxu0 %v182
        %258 = vmatprep.subr.mxu0 0.0
        %259 = vmatpush1.msra.mxu0 %v183
        %260 = vmatprep.subr.mxu0 0.0
        %261 = vmatpush1.msra.mxu0 %v184
        %262 = vmatprep.subr.mxu0 0.0
        %263 = vmatpush1.msra.mxu0 %v185
        %264 = vmatprep.subr.mxu0 0.0
        %265 = vmatpush1.msra.mxu0 %v186
        %266 = vmatprep.subr.mxu0 0.0
        %267 = vmatpush1.msra.mxu0 %v187
        %268 = vmatprep.subr.mxu0 0.0
        %269 = vmatpush1.msra.mxu0 %v188
        %270 = vmatprep.subr.mxu0 0.0
        %271 = vmatpush1.msra.mxu0 %v189
        %272 = vmatprep.subr.mxu0 0.0
        %273 = vmatpush1.msra.mxu0 %v190
        %274 = vmatprep.subr.mxu0 0.0
        %275 = vmatpush1.msra.mxu0 %v191
        %276 = vmatprep.subr.mxu0 0.0
        %277 = vmatpush1.msra.mxu0 %v192
        %278 = vmatprep.subr.mxu0 0.0
        %279 = vmatpush1.msra.mxu0 %v193
        %280 = vmatprep.subr.mxu0 0.0
        %281 = vmatpush1.msra.mxu0 %v194
        %282 = vmatprep.subr.mxu0 0.0
        %283 = vmatpush1.msra.mxu0 %v195
        %284 = vmatprep.subr.mxu0 0.0
        %285 = vmatpush1.msra.mxu0 %v196
        %286 = vmatprep.subr.mxu0 0.0
        %287 = vmatpush1.msra.mxu0 %v197
        %288 = vmatprep.subr.mxu0 0.0
        %289 = vmatpush1.msra.mxu0 %v198
        %290 = vmatprep.subr.mxu0 0.0
        %291 = vmatpush1.msra.mxu0 %v199
        %292 = vmatprep.subr.mxu0 0.0
        %293 = vmatpush1.msra.mxu0 %v200
        %294 = vmatprep.subr.mxu0 0.0
        %295 = vmatpush1.msra.mxu0 %v201
        %296 = vmatprep.subr.mxu0 0.0
        %297 = vmatpush1.msra.mxu0 %v202
        %298 = vmatprep.subr.mxu0 0.0
        %299 = vmatpush1.msra.mxu0 %v203
        %300 = vmatprep.subr.mxu0 0.0
        %301 = vmatpush1.msra.mxu0 %v204
        %302 = vmatprep.subr.mxu0 0.0
        %303 = vmatpush1.msra.mxu0 %v205
        %304 = vmatprep.mubr.f32.mxu0 %v171
        %305 = vmatmul.mubr.f32.gmra.mrb[0].mxu0 %v170
        %v306 = vpop.f32.mrb[0].mxu0
        %v307 = vadd.f32 %v239, %v306
        %v308 = vpop.f32.mrb[0].mxu0
        %309 = vdwg.mxu0
        %310 = vmatprep.subr.mxu0 0.0
        %311 = vmatpush1.msra.mxu0 %v206
        %312 = vmatprep.subr.mxu0 0.0
        %313 = vmatpush1.msra.mxu0 %v207
        %314 = vmatprep.subr.mxu0 0.0
        %315 = vmatpush1.msra.mxu0 %v208
        %316 = vmatprep.subr.mxu0 0.0
        %317 = vmatpush1.msra.mxu0 %v209
        %318 = vmatprep.subr.mxu0 0.0
        %319 = vmatpush1.msra.mxu0 %v210
        %320 = vmatprep.subr.mxu0 0.0
        %321 = vmatpush1.msra.mxu0 %v211
        %322 = vmatprep.subr.mxu0 0.0
        %323 = vmatpush1.msra.mxu0 %v212
        %324 = vmatprep.subr.mxu0 0.0
        %325 = vmatpush1.msra.mxu0 %v213
        %326 = vmatprep.subr.mxu0 0.0
        %327 = vmatpush1.msra.mxu0 %v214
        %328 = vmatprep.subr.mxu0 0.0
        %329 = vmatpush1.msra.mxu0 %v215
        %330 = vmatprep.subr.mxu0 0.0
        %331 = vmatpush1.msra.mxu0 %v216
        %332 = vmatprep.subr.mxu0 0.0
        %333 = vmatpush1.msra.mxu0 %v217
        %334 = vmatprep.subr.mxu0 0.0
        %335 = vmatpush1.msra.mxu0 %v218
        %336 = vmatprep.subr.mxu0 0.0
        %337 = vmatpush1.msra.mxu0 %v219
        %338 = vmatprep.subr.mxu0 0.0
        %339 = vmatpush1.msra.mxu0 %v220
        %340 = vmatprep.subr.mxu0 0.0
        %341 = vmatpush1.msra.mxu0 %v221
        %342 = vmatprep.subr.mxu0 0.0
        %343 = vmatpush1.msra.mxu0 %v222
        %344 = vmatprep.subr.mxu0 0.0
        %345 = vmatpush1.msra.mxu0 %v223
        %346 = vmatprep.subr.mxu0 0.0
        %347 = vmatpush1.msra.mxu0 %v224
        %348 = vmatprep.subr.mxu0 0.0
        %349 = vmatpush1.msra.mxu0 %v225
        %350 = vmatprep.subr.mxu0 0.0
        %351 = vmatpush1.msra.mxu0 %v226
        %352 = vmatprep.subr.mxu0 0.0
        %353 = vmatpush1.msra.mxu0 %v227
        %354 = vmatprep.subr.mxu0 0.0
        %355 = vmatpush1.msra.mxu0 %v228
        %356 = vmatprep.subr.mxu0 0.0
        %357 = vmatpush1.msra.mxu0 %v229
        %358 = vmatprep.subr.mxu0 0.0
        %359 = vmatpush1.msra.mxu0 %v230
        %360 = vmatprep.subr.mxu0 0.0
        %361 = vmatpush1.msra.mxu0 %v231
        %362 = vmatprep.subr.mxu0 0.0
        %363 = vmatpush1.msra.mxu0 %v232
        %364 = vmatprep.subr.mxu0 0.0
        %365 = vmatpush1.msra.mxu0 %v233
        %366 = vmatprep.subr.mxu0 0.0
        %367 = vmatpush1.msra.mxu0 %v234
        %368 = vmatprep.subr.mxu0 0.0
        %369 = vmatpush1.msra.mxu0 %v235
        %370 = vmatprep.subr.mxu0 0.0
        %371 = vmatpush1.msra.mxu0 %v236
        %372 = vmatprep.subr.mxu0 0.0
        %373 = vmatpush1.msra.mxu0 %v237
        %374 = vmatprep.mubr.f32.mxu0 %v173
        %375 = vmatmul.mubr.f32.gmra.mrb[0].mxu0 %v172
        %v376 = vpop.f32.mrb[0].mxu0
        %v377 = vadd.f32 %v307, %v376
        %v378 = vpop.f32.mrb[0].mxu0
        %379 = vdwg.mxu0
        %vm380 = vcmask 130048
        %381 = vst.msk [vmem:[%s164] sm:$0xff] %vm380, %v377
        %s382 = sand.u32 %s94, 1
        %s383 = scalar_lea.sflag [#allocation4], %s382
        %s384 = sand.u32 %s94, 1
        %s385 = smul.addr %s384, 8
        %s386 = scalar_lea.vmem [#allocation3], %s385
        // Predicated region
        $region33: #{tpu_custom_call.1} parent=31 // pred_check
          %p387 = pneg %p104
        $region34: #{tpu_custom_call.1} parent=31 // pred_check_branch
          %389 = sbr.rel (%p387) target = $region36
        $region35: #{tpu_custom_call.1} parent=31 // pred_region
          %s391 = ssub.s32 128, 128
          %392 = vsyncadd %s383, %s391
          %s393 = smul.addr %s18, 128
          %s394 = scalar_lea.hbm %s3, %s393
          %s396 = sshll.u32 %s386, 4
          %s397 = int_to_ptr.vmem [resolvable:$true] %s396
          %399 = dma.vmem_to_hbm [thread:$0]  %s397, 128, %s394, %s383
        $region36: #{tpu_custom_call.1} parent=31 // pred_fallthru
          _
      $region32: #{tpu_custom_call.1} parent=5 // pred_fallthru
        _
      %p400 = scmp.le.s32.totalorder 2, %s13
      // Predicated region
      $region37: #{tpu_custom_call.1} parent=5 // pred_check
        %p401 = pneg %p400
      $region38: #{tpu_custom_call.1} parent=5 // pred_check_branch
        %403 = sbr.rel (%p401) target = $region40
      $region39: #{tpu_custom_call.1} parent=5 // pred_region
        %s404 = ssub.s32 %s13, 2
        // Predicated region
        $region41: #{tpu_custom_call.1} parent=39 // pred_check
          %p405 = pneg %p110
        $region42: #{tpu_custom_call.1} parent=39 // pred_check_branch
          %407 = sbr.rel (%p405) target = $region44
        $region43: #{tpu_custom_call.1} parent=39 // pred_region
          %s408 = sand.u32 %s95, 1
          %s409 = scalar_lea.sflag [#allocation4], %s408
          %s410 = sand.u32 %s95, 1
          %s411 = smul.addr %s410, 8
          %s412 = scalar_lea.vmem [#allocation3], %s411
          %413 = dma.done %s409, 128
        $region44: #{tpu_custom_call.1} parent=39 // pred_fallthru
          _
      $region40: #{tpu_custom_call.1} parent=5 // pred_fallthru
        _
    $region6: #{tpu_custom_call.1} parent=1 // loop_footer
      %s17 = sadd.s32 1, %s13
    $region7: #{tpu_custom_call.1} parent=1 // loop_footer_branch
      %12 = sbr.rel target = $region3
    $region8: #{tpu_custom_call.1} parent=1 // loop_exit
      _
    %414 = vsyncpa [#allocation4], 1
    %s415 = scalar_lea.sflag [#allocation4], 1
    %416 = vsyncpa %s415, 1

</llo_original>
